<compile_context>
chip_gen: v5e
topology: v5e:2x2
jax: 0.10.0
libtpu: 0.0.40
codegen_flags: <defaults>
</compile_context>

<pallas_src>
import jax
import jax.numpy as jnp
from jax import lax
from jax.experimental import pallas as pl
from jax.experimental.pallas import tpu as pltpu

block_size = 128
n_embd = 384


def _head_kernel(x_ref, w_ref, mask_ref, o_ref):
    # x_ref:    (Bb, T, C)   bf16
    # w_ref:    (C, 3*H)     bf16   columns = [Wk | Wq * H**-0.5 | Wv]
    # mask_ref: (T, T)       f32    additive causal mask (0 / -1e30)
    # o_ref:    (Bb, T, H)   f32
    Bb, T, C = x_ref.shape
    H = o_ref.shape[-1]

    # Fused QKV projection: one wide MXU pass, f32 accumulation.
    x2 = x_ref[...].reshape(Bb * T, C)
    kqv = jnp.dot(x2, w_ref[...], preferred_element_type=jnp.float32)   # (Bb*T, 3H) f32

    k = kqv[:, 0 * H:1 * H].reshape(Bb, T, H).astype(jnp.bfloat16)
    q = kqv[:, 1 * H:2 * H].reshape(Bb, T, H).astype(jnp.bfloat16)      # scale already folded in
    v = kqv[:, 2 * H:3 * H].reshape(Bb, T, H).astype(jnp.bfloat16)

    # q @ k^T without materializing k.T (transpose folded into the MXU operand feed).
    wei = jnp.einsum('bqd,bkd->bqk', q, k,
                     preferred_element_type=jnp.float32)                # (Bb, T, T) f32
    wei = wei + mask_ref[...]                                           # additive causal mask

    # Numerically stable softmax; approx reciprocal runs on the otherwise-idle EUP.
    m = jnp.max(wei, axis=-1, keepdims=True)
    e = jnp.exp(wei - m)
    denom = jnp.sum(e, axis=-1, keepdims=True)
    p = (e * pl.reciprocal(denom, approx=True)).astype(jnp.bfloat16)

    out = jnp.einsum('bqk,bkd->bqd', p, v,
                     preferred_element_type=jnp.float32)                # (Bb, T, H) f32
    o_ref[...] = out.astype(o_ref.dtype)


def _pick_batch_block(B):
    # Several batch elements per grid step amortize per-step overhead, but keep
    # the grid length >= 2 when possible so both v7x TensorCores get work.
    for bb in (8, 4, 2):
        if B % bb == 0 and B // bb >= 2:
            return bb
    return 1


def head_forward(x, wk, wq, wv):
    """x: (B, T, C) f32; wk/wq/wv: (C, H) f32 (already transposed from PyTorch (H, C))."""
    B, T, C = x.shape
    H = wk.shape[1]
    Bb = _pick_batch_block(B)

    # Fuse the three projections into one (C, 3H) weight, fold the 1/sqrt(H)
    # attention scale into Wq, and feed the MXU bf16 operands.
    scale = jnp.float32(H) ** jnp.float32(-0.5)
    w_fused = jnp.concatenate([wk, wq * scale, wv], axis=1).astype(jnp.bfloat16)
    x_bf16 = x.astype(jnp.bfloat16)

    # Precomputed additive causal mask; constant index_map keeps it VMEM-resident.
    row = lax.broadcasted_iota(jnp.int32, (T, T), 0)
    col = lax.broadcasted_iota(jnp.int32, (T, T), 1)
    mask = jnp.where(col <= row, 0.0, -1e30).astype(jnp.float32)

    return pl.pallas_call(
        _head_kernel,
        out_shape=jax.ShapeDtypeStruct((B, T, H), x.dtype),
        grid_spec=pltpu.PrefetchScalarGridSpec(
            num_scalar_prefetch=0,
            grid=(B // Bb,),
            in_specs=[
                pl.BlockSpec((Bb, T, C), lambda b: (b, 0, 0)),
                pl.BlockSpec((C, 3 * H), lambda b: (0, 0)),
                pl.BlockSpec((T, T), lambda b: (0, 0)),
            ],
            out_specs=pl.BlockSpec((Bb, T, H), lambda b: (b, 0, 0)),
        ),
        compiler_params=pltpu.CompilerParams(
            dimension_semantics=("parallel",),
        ),
    )(x_bf16, w_fused, mask)


def _reference(x, wk, wq, wv):
    k = x @ wk
    q = x @ wq
    v = x @ wv
    T = x.shape[1]
    wei = (q @ jnp.swapaxes(k, -2, -1)) * (k.shape[-1] ** -0.5)
    tril = jnp.tril(jnp.ones((T, T), dtype=bool))
    wei = jnp.where(tril, wei, -jnp.inf)
    wei = jax.nn.softmax(wei, axis=-1)
    return wei @ v


if __name__ == "__main__":
    B, T, C = 2, 128, n_embd          # T == block_size
    head_size = 64

    key = jax.random.PRNGKey(0)
    kx, kk, kq, kv = jax.random.split(key, 4)

    x = jax.random.normal(kx, (B, T, C), dtype=jnp.float32)

    # Deterministic "nn.Linear(n_embd, head_size, bias=False)" weights.
    # PyTorch stores them as (head_size, n_embd); we transpose to (n_embd, head_size).
    bound = 1.0 / (n_embd ** 0.5)
    wk = jax.random.uniform(kk, (head_size, n_embd), jnp.float32, -bound, bound).T
    wq = jax.random.uniform(kq, (head_size, n_embd), jnp.float32, -bound, bound).T
    wv = jax.random.uniform(kv, (head_size, n_embd), jnp.float32, -bound, bound).T

    out = jax.block_until_ready(head_forward(x, wk, wq, wv))

    ref = _reference(x, wk, wq, wv)
    assert out.shape == (B, T, head_size)
    max_err = float(jnp.max(jnp.abs(out - ref)))
    # bf16 MXU operands + approx reciprocal -> looser tolerance than a pure f32 path.
    assert jnp.allclose(out, ref, atol=5e-2, rtol=5e-2), f"mismatch vs reference (max abs err {max_err})"

    print("KERNEL_OK")
</pallas_src>

<mosaic_0001>
module attributes {stable_mosaic.version = 11 : i64} {
  func.func @_head_kernel(%arg0: i32, %arg1: memref<1x128x384xbf16, #tpu.memory_space<vmem>>, %arg2: memref<384x192xbf16, #tpu.memory_space<vmem>>, %arg3: memref<128x128xf32, #tpu.memory_space<vmem>>, %arg4: memref<1x128x64xf32, #tpu.memory_space<vmem>>) attributes {dimension_semantics = [#tpu.dimension_semantics<parallel>], iteration_bounds = array<i64: 2>, scalar_prefetch = 0 : i64, scratch_operands = 0 : i64, tpu.core_type = #tpu.core_type<tc>, window_params = [{transform_indices = @transform_0, window_bounds = array<i64: 1, 128, 384>}, {pipeline_mode = #tpu.pipeline_mode<synchronous>, transform_indices = @transform_1, window_bounds = array<i64: 384, 192>}, {pipeline_mode = #tpu.pipeline_mode<synchronous>, transform_indices = @transform_2, window_bounds = array<i64: 128, 128>}, {transform_indices = @transform_3, window_bounds = array<i64: 1, 128, 64>}]} {
    %c0 = arith.constant 0 : index
    %c0_0 = arith.constant 0 : index
    %c0_1 = arith.constant 0 : index
    %0 = vector.load %arg1[%c0, %c0_0, %c0_1] : memref<1x128x384xbf16, #tpu.memory_space<vmem>>, vector<1x128x384xbf16>
    %1 = vector.shape_cast %0 : vector<1x128x384xbf16> to vector<128x384xbf16>
    %c0_2 = arith.constant 0 : index
    %c0_3 = arith.constant 0 : index
    %2 = vector.load %arg2[%c0_2, %c0_3] : memref<384x192xbf16, #tpu.memory_space<vmem>>, vector<384x192xbf16>
    %cst = arith.constant dense<0.000000e+00> : vector<128x192xf32>
    %3 = tpu.matmul %1, %2, %cst {dimension_numbers = #tpu.dot_dimension_numbers<[1], [0], [0], [1], [0, 0, 1, 1], [], []>} : vector<128x384xbf16>, vector<384x192xbf16>, vector<128x192xf32> -> vector<128x192xf32>
    %4 = vector.extract_strided_slice %3 {offsets = [0, 0], sizes = [128, 64], strides = [1, 1]} : vector<128x192xf32> to vector<128x64xf32>
    %5 = vector.shape_cast %4 : vector<128x64xf32> to vector<1x128x64xf32>
    %6 = arith.truncf %5 : vector<1x128x64xf32> to vector<1x128x64xbf16>
    %7 = vector.extract_strided_slice %3 {offsets = [0, 64], sizes = [128, 64], strides = [1, 1]} : vector<128x192xf32> to vector<128x64xf32>
    %8 = vector.shape_cast %7 : vector<128x64xf32> to vector<1x128x64xf32>
    %9 = arith.truncf %8 : vector<1x128x64xf32> to vector<1x128x64xbf16>
    %10 = vector.extract_strided_slice %3 {offsets = [0, 128], sizes = [128, 64], strides = [1, 1]} : vector<128x192xf32> to vector<128x64xf32>
    %11 = vector.shape_cast %10 : vector<128x64xf32> to vector<1x128x64xf32>
    %12 = arith.truncf %11 : vector<1x128x64xf32> to vector<1x128x64xbf16>
    "tpu.trace_start"() <{level = 10 : i32, message = "bqd,bkd->bqk"}> : () -> ()
    %cst_4 = arith.constant dense<0.000000e+00> : vector<1x128x128xf32>
    %13 = tpu.matmul %9, %6, %cst_4 {dimension_numbers = #tpu.dot_dimension_numbers<[2], [2], [1], [1], [0, 0, 0, 1, 1, 1], [0], [0]>} : vector<1x128x64xbf16>, vector<1x128x64xbf16>, vector<1x128x128xf32> -> vector<1x128x128xf32>
    "tpu.trace_stop"() : () -> ()
    %c0_5 = arith.constant 0 : index
    %c0_6 = arith.constant 0 : index
    %14 = vector.load %arg3[%c0_5, %c0_6] : memref<128x128xf32, #tpu.memory_space<vmem>>, vector<128x128xf32>
    %15 = vector.shape_cast %14 : vector<128x128xf32> to vector<1x128x128xf32>
    %16 = arith.addf %13, %15 : vector<1x128x128xf32>
    %cst_7 = arith.constant dense<0xFF800000> : vector<1x128xf32>
    %17 = vector.multi_reduction <maximumf>, %16, %cst_7 [2] : vector<1x128x128xf32> to vector<1x128xf32>
    %18 = vector.shape_cast %17 : vector<1x128xf32> to vector<1x128x1xf32>
    %19 = vector.broadcast %18 : vector<1x128x1xf32> to vector<1x128x128xf32>
    %20 = arith.subf %16, %19 : vector<1x128x128xf32>
    %21 = math.exp %20 : vector<1x128x128xf32>
    %cst_8 = arith.constant dense<0.000000e+00> : vector<1x128xf32>
    %22 = vector.multi_reduction <add>, %21, %cst_8 [2] : vector<1x128x128xf32> to vector<1x128xf32>
    %23 = vector.shape_cast %22 : vector<1x128xf32> to vector<1x128x1xf32>
    %24 = tpu.reciprocal %23 {approx = true} : vector<1x128x1xf32> -> vector<1x128x1xf32>
    %25 = vector.broadcast %24 : vector<1x128x1xf32> to vector<1x128x128xf32>
    %26 = arith.mulf %21, %25 : vector<1x128x128xf32>
    %27 = arith.truncf %26 : vector<1x128x128xf32> to vector<1x128x128xbf16>
    "tpu.trace_start"() <{level = 10 : i32, message = "bqk,bkd->bqd"}> : () -> ()
    %cst_9 = arith.constant dense<0.000000e+00> : vector<1x128x64xf32>
    %28 = tpu.matmul %27, %12, %cst_9 {dimension_numbers = #tpu.dot_dimension_numbers<[2], [1], [1], [2], [0, 0, 0, 1, 1, 2], [0], [0]>} : vector<1x128x128xbf16>, vector<1x128x64xbf16>, vector<1x128x64xf32> -> vector<1x128x64xf32>
    "tpu.trace_stop"() : () -> ()
    %c0_10 = arith.constant 0 : index
    %c0_11 = arith.constant 0 : index
    %c0_12 = arith.constant 0 : index
    %29 = vector.load %arg4[%c0_10, %c0_11, %c0_12] : memref<1x128x64xf32, #tpu.memory_space<vmem>>, vector<1x128x64xf32>
    tpu.vector_store %arg4[%c0_10, %c0_11, %c0_12], %28 {strides = array<i32>} : memref<1x128x64xf32, #tpu.memory_space<vmem>>, vector<1x128x64xf32>,
    return
  }
  func.func @transform_0(%arg0: i32) -> (i32, i32, i32) {
    %c0_i32 = arith.constant 0 : i32
    %c0_i32_0 = arith.constant 0 : i32
    %c0_i32_1 = arith.constant 0 : i32
    return %arg0, %c0_i32, %c0_i32_0 : i32, i32, i32
  }
  func.func @transform_1(%arg0: i32) -> (i32, i32) {
    %c0_i32 = arith.constant 0 : i32
    %c0_i32_0 = arith.constant 0 : i32
    %c0_i32_1 = arith.constant 0 : i32
    return %c0_i32, %c0_i32_0 : i32, i32
  }
  func.func @transform_2(%arg0: i32) -> (i32, i32) {
    %c0_i32 = arith.constant 0 : i32
    %c0_i32_0 = arith.constant 0 : i32
    %c0_i32_1 = arith.constant 0 : i32
    return %c0_i32, %c0_i32_0 : i32, i32
  }
  func.func @transform_3(%arg0: i32) -> (i32, i32, i32) {
    %c0_i32 = arith.constant 0 : i32
    %c0_i32_0 = arith.constant 0 : i32
    %c0_i32_1 = arith.constant 0 : i32
    return %arg0, %c0_i32, %c0_i32_0 : i32, i32, i32
  }
}

</mosaic_0001>

<llo_original>
// kernel: tpu_custom_call.1
$region0: #{tpu_custom_call.1}
  #allocation0 [shape = 'u32[]', space=smem, size = 0x4, offset = 0x4, fixed_abs, tag = 'smem constant byte address 0x4 - core index']
  #allocation1 [shape = 'u32[72,128]{1,0:T(1,128)}', space=vmem, size = 0x9000, scoped, tag = 'internal scratch']
  %s0 = inlined_call_operand.vmem [shape: bf16[2,128,384], index: 0, kind: input, shape index: {}]
  %s1 = inlined_call_operand.vmem [shape: bf16[384,192], index: 1, kind: input, shape index: {}]
  %s2 = inlined_call_operand.vmem [shape: f32[128,128], index: 2, kind: input, shape index: {}]
  %s3 = inlined_call_operand.vmem [shape: f32[2,128,64], index: 3, kind: output, shape index: {}]
  %s4 = sld [smem:[#allocation0]]
  $region45: #{tpu_custom_call.1} parent=0
    _
  %s6 = ssub.s32 1, %s4
  %s7 = scalar_select 0, %s6, %s4
  loop: start=0, step=1, limit=4
  $region2: #{tpu_custom_call.1} parent=0 // loop_pre_header
    _
  $region3: #{tpu_custom_call.1} parent=0 // loop_header
    %s9 = sphi 0, %s13
    %p10 = scmp.ge.s32.totalorder %s9, 4
    %s19 = sphi 0, %s21
    %s22 = sphi 0, %s19
    %s23 = sphi 0, %s22
    %s39 = sphi 0, %s23
    %s43 = sphi 0, %s43
    %s45 = sphi 0, %s43
    %s46 = sphi 0, %s45
    %s60 = sphi 0, %s46
    %s64 = sphi 0, %s64
    %s66 = sphi 0, %s64
    %s67 = sphi 0, %s66
    %s81 = sphi 0, %s67
    %s87 = sphi 0, %s89
    %s90 = sphi 0, %s87
    %s91 = sphi 0, %s90
    %s107 = sphi 0, %s91
  $region4: #{tpu_custom_call.1} parent=0 // loop_header_branch
    %12 = sbr.rel (%p10) target = $region8
  $region5: #{tpu_custom_call.1} parent=0 // loop_body
    %s14 = ssub.s32 %s9, 1
    %s15 = ssub.s32 %s9, 2
    %s16 = sadd.s32 %s9, 1
    %s17 = ssub.s32 %s9, %s16
    %p18 = scmp.eq.s32.totalorder %s17, 0
    %s20 = sadd.s32 %s19, 1
    %s21 = scalar_select %p18, %s19, %s20
    %p24 = pneg %p18
    %p25 = scmp.eq.s32.totalorder %s9, 1
    %p26 = por %p24, %p25
    %p27 = scmp.ne.s32.totalorder %s19, %s22
    %p28 = scmp.eq.s32.totalorder %s9, 0
    %p29 = por %p27, %p28
    %p30 = scmp.ne.s32.totalorder %s19, %s22
    %p31 = scmp.eq.s32.totalorder %s14, 1
    %p32 = por %p30, %p31
    %p33 = scmp.ne.s32.totalorder %s22, %s23
    %p34 = scmp.eq.s32.totalorder %s14, 0
    %p35 = por %p33, %p34
    %p36 = scmp.ne.s32.totalorder %s22, %s23
    %p37 = scmp.eq.s32.totalorder %s15, 1
    %p38 = por %p36, %p37
    %p40 = scmp.ne.s32.totalorder %s23, %s39
    %p41 = scmp.eq.s32.totalorder %s15, 0
    %p42 = por %p40, %p41
    %s44 = sadd.s32 %s43, 1
    %p47 = scmp.eq.s32.totalorder %s9, 1
    %p48 = scmp.ne.s32.totalorder %s43, %s45
    %p49 = scmp.eq.s32.totalorder %s9, 0
    %p50 = por %p48, %p49
    %p51 = scmp.ne.s32.totalorder %s43, %s45
    %p52 = scmp.eq.s32.totalorder %s14, 1
    %p53 = por %p51, %p52
    %p54 = scmp.ne.s32.totalorder %s45, %s46
    %p55 = scmp.eq.s32.totalorder %s14, 0
    %p56 = por %p54, %p55
    %p57 = scmp.ne.s32.totalorder %s45, %s46
    %p58 = scmp.eq.s32.totalorder %s15, 1
    %p59 = por %p57, %p58
    %p61 = scmp.ne.s32.totalorder %s46, %s60
    %p62 = scmp.eq.s32.totalorder %s15, 0
    %p63 = por %p61, %p62
    %s65 = sadd.s32 %s64, 1
    %p68 = scmp.eq.s32.totalorder %s9, 1
    %p69 = scmp.ne.s32.totalorder %s64, %s66
    %p70 = scmp.eq.s32.totalorder %s9, 0
    %p71 = por %p69, %p70
    %p72 = scmp.ne.s32.totalorder %s64, %s66
    %p73 = scmp.eq.s32.totalorder %s14, 1
    %p74 = por %p72, %p73
    %p75 = scmp.ne.s32.totalorder %s66, %s67
    %p76 = scmp.eq.s32.totalorder %s14, 0
    %p77 = por %p75, %p76
    %p78 = scmp.ne.s32.totalorder %s66, %s67
    %p79 = scmp.eq.s32.totalorder %s15, 1
    %p80 = por %p78, %p79
    %p82 = scmp.ne.s32.totalorder %s67, %s81
    %p83 = scmp.eq.s32.totalorder %s15, 0
    %p84 = por %p82, %p83
    %s85 = ssub.s32 %s9, %s16
    %p86 = scmp.eq.s32.totalorder %s85, 0
    %s88 = sadd.s32 %s87, 1
    %s89 = scalar_select %p86, %s87, %s88
    %p92 = pneg %p86
    %p93 = scmp.eq.s32.totalorder %s9, 1
    %p94 = por %p92, %p93
    %p95 = scmp.ne.s32.totalorder %s87, %s90
    %p96 = scmp.eq.s32.totalorder %s9, 0
    %p97 = por %p95, %p96
    %p98 = scmp.ne.s32.totalorder %s87, %s90
    %p99 = scmp.eq.s32.totalorder %s14, 1
    %p100 = por %p98, %p99
    %p101 = scmp.ne.s32.totalorder %s90, %s91
    %p102 = scmp.eq.s32.totalorder %s14, 0
    %p103 = por %p101, %p102
    %p104 = scmp.ne.s32.totalorder %s90, %s91
    %p105 = scmp.eq.s32.totalorder %s15, 1
    %p106 = por %p104, %p105
    %p108 = scmp.ne.s32.totalorder %s91, %s107
    %p109 = scmp.eq.s32.totalorder %s15, 0
    %p110 = por %p108, %p109
    %p111 = scmp.le.s32.totalorder 1, %s9
    %p112 = scmp.lt.s32.totalorder %s9, 3
    %p113 = pnand %p111, %p112
    %p114 = pneg %p113
    // Predicated region
    $region9: #{tpu_custom_call.1} parent=5 // pred_check
      _
    $region10: #{tpu_custom_call.1} parent=5 // pred_check_branch
      %116 = sbr.rel (%p113) target = $region12
    $region11: #{tpu_custom_call.1} parent=5 // pred_region
      %s117 = ssub.s32 %s9, 1
      // Predicated region
      $region13: #{tpu_custom_call.1} parent=11 // pred_check
        %p118 = pneg %p56
      $region14: #{tpu_custom_call.1} parent=11 // pred_check_branch
        %120 = sbr.rel (%p118) target = $region16
      $region15: #{tpu_custom_call.1} parent=11 // pred_region
        _
      $region16: #{tpu_custom_call.1} parent=11 // pred_fallthru
        _
      // Predicated region
      $region17: #{tpu_custom_call.1} parent=11 // pred_check
        %p121 = pneg %p77
      $region18: #{tpu_custom_call.1} parent=11 // pred_check_branch
        %123 = sbr.rel (%p121) target = $region20
      $region19: #{tpu_custom_call.1} parent=11 // pred_region
        _
      $region20: #{tpu_custom_call.1} parent=11 // pred_fallthru
        _
    $region12: #{tpu_custom_call.1} parent=5 // pred_fallthru
      _
    %p124 = scmp.lt.s32.totalorder %s9, 2
    // Predicated region
    $region21: #{tpu_custom_call.1} parent=5 // pred_check
      %p125 = pneg %p124
    $region22: #{tpu_custom_call.1} parent=5 // pred_check_branch
      %127 = sbr.rel (%p125) target = $region24
    $region23: #{tpu_custom_call.1} parent=5 // pred_region
      // Predicated region
      $region25: #{tpu_custom_call.1} parent=23 // pred_check
        %p128 = pneg %p29
      $region26: #{tpu_custom_call.1} parent=23 // pred_check_branch
        %130 = sbr.rel (%p128) target = $region28
      $region27: #{tpu_custom_call.1} parent=23 // pred_region
        %p131 = scmp.lt.s32.totalorder %s9, 1
        %s132 = scalar_select %p131, %s9, 1
        %s133 = smul.addr %s132, 48
        %s134 = smul.addr %s133, 4
        %s135 = scalar_lea.vmem %s0, %s134
      $region28: #{tpu_custom_call.1} parent=23 // pred_fallthru
        _
    $region24: #{tpu_custom_call.1} parent=5 // pred_fallthru
      _
    %p136 = scmp.le.s32.totalorder 1, %s9
    %p137 = scmp.lt.s32.totalorder %s9, 3
    %p138 = pnand %p136, %p137
    %p139 = pneg %p138
    // Predicated region
    $region29: #{tpu_custom_call.1} parent=5 // pred_check
      _
    $region30: #{tpu_custom_call.1} parent=5 // pred_check_branch
      %141 = sbr.rel (%p138) target = $region32
    $region31: #{tpu_custom_call.1} parent=5 // pred_region
      %s142 = ssub.s32 %s9, 1
      %p143 = scmp.lt.s32.totalorder %s14, 1
      %s144 = scalar_select %p143, %s14, 1
      %s145 = smul.addr %s144, 48
      %s146 = smul.addr %s145, 4
      %s147 = scalar_lea.vmem %s0, %s146
      %p148 = pneg %p35
      %p149 = pneg %p32
      %p150 = pneg %p56
      %p151 = pneg %p53
      %p152 = pneg %p77
      %p153 = pneg %p74
      %p154 = pneg %p103
      %p155 = pneg %p100
      %p156 = scmp.lt.s32.totalorder %s14, 1
      %s157 = scalar_select %p156, %s14, 1
      %s158 = smul.addr %s157, 16
      %s159 = smul.addr %s158, 8
      %s160 = scalar_lea.vmem %s3, %s159
      %p161 = scmp.lt.s32.totalorder %s14, 1
      %s162 = scalar_select %p161, %s14, 1
      %s163 = smul.addr %s162, 48
      %s164 = smul.addr %s163, 4
      %s165 = scalar_lea.vmem %s0, %s164
      %p166 = scmp.lt.s32.totalorder %s14, 1
      %s167 = scalar_select %p166, %s14, 1
      %s168 = smul.addr %s167, 16
      %s169 = smul.addr %s168, 8
      %s170 = scalar_lea.vmem %s3, %s169
      %v171 = vld [vmem:[%s165] sm:$0xff]
      %v172 = vld [vmem:[%s165 + $0x8] sm:$0xf]
      %v173 = vld [vmem:[%s165 + $0xc] sm:$0xff]
      %v174 = vld [vmem:[%s165 + $0x14] sm:$0xf]
      %v175 = vld [vmem:[%s165 + $0x18] sm:$0xff]
      %v176 = vld [vmem:[%s165 + $0x20] sm:$0xf]
      %v177 = vld [vmem:[%s165 + $0x24] sm:$0xff]
      %v178 = vld [vmem:[%s165 + $0x2c] sm:$0xf]
      %v179 = vld [vmem:[%s165 + $0x30] sm:$0xff]
      %v180 = vld [vmem:[%s165 + $0x38] sm:$0xf]
      %v181 = vld [vmem:[%s165 + $0x3c] sm:$0xff]
      %v182 = vld [vmem:[%s165 + $0x44] sm:$0xf]
      %v183 = vld [vmem:[%s165 + $0x48] sm:$0xff]
      %v184 = vld [vmem:[%s165 + $0x50] sm:$0xf]
      %v185 = vld [vmem:[%s165 + $0x54] sm:$0xff]
      %v186 = vld [vmem:[%s165 + $0x5c] sm:$0xf]
      %v187 = vld [vmem:[%s165 + $0x60] sm:$0xff]
      %v188 = vld [vmem:[%s165 + $0x68] sm:$0xf]
      %v189 = vld [vmem:[%s165 + $0x6c] sm:$0xff]
      %v190 = vld [vmem:[%s165 + $0x74] sm:$0xf]
      %v191 = vld [vmem:[%s165 + $0x78] sm:$0xff]
      %v192 = vld [vmem:[%s165 + $0x80] sm:$0xf]
      %v193 = vld [vmem:[%s165 + $0x84] sm:$0xff]
      %v194 = vld [vmem:[%s165 + $0x8c] sm:$0xf]
      %v195 = vld [vmem:[%s165 + $0x90] sm:$0xff]
      %v196 = vld [vmem:[%s165 + $0x98] sm:$0xf]
      %v197 = vld [vmem:[%s165 + $0x9c] sm:$0xff]
      %v198 = vld [vmem:[%s165 + $0xa4] sm:$0xf]
      %v199 = vld [vmem:[%s165 + $0xa8] sm:$0xff]
      %v200 = vld [vmem:[%s165 + $0xb0] sm:$0xf]
      %v201 = vld [vmem:[%s165 + $0xb4] sm:$0xff]
      %v202 = vld [vmem:[%s165 + $0xbc] sm:$0xf]
      %v203 = vld [vmem:[%s1] sm:$0xff]
      %v204 = vld [vmem:[%s1 + $0x8] sm:$0xff]
      %v205 = vld [vmem:[%s1 + $0x10] sm:$0xff]
      %v206 = vld [vmem:[%s1 + $0x18] sm:$0xff]
      %v207 = vld [vmem:[%s1 + $0x20] sm:$0xff]
      %v208 = vld [vmem:[%s1 + $0x28] sm:$0xff]
      %v209 = vld [vmem:[%s1 + $0x30] sm:$0xff]
      %v210 = vld [vmem:[%s1 + $0x38] sm:$0xff]
      %v211 = vld [vmem:[%s1 + $0x40] sm:$0xff]
      %v212 = vld [vmem:[%s1 + $0x48] sm:$0xff]
      %v213 = vld [vmem:[%s1 + $0x50] sm:$0xff]
      %v214 = vld [vmem:[%s1 + $0x58] sm:$0xff]
      %v215 = vld [vmem:[%s1 + $0x60] sm:$0xff]
      %v216 = vld [vmem:[%s1 + $0x68] sm:$0xff]
      %v217 = vld [vmem:[%s1 + $0x70] sm:$0xff]
      %v218 = vld [vmem:[%s1 + $0x78] sm:$0xff]
      %v219 = vld [vmem:[%s1 + $0x80] sm:$0xff]
      %v220 = vld [vmem:[%s1 + $0x88] sm:$0xff]
      %v221 = vld [vmem:[%s1 + $0x90] sm:$0xff]
      %v222 = vld [vmem:[%s1 + $0x98] sm:$0xff]
      %v223 = vld [vmem:[%s1 + $0xa0] sm:$0xff]
      %v224 = vld [vmem:[%s1 + $0xa8] sm:$0xff]
      %v225 = vld [vmem:[%s1 + $0xb0] sm:$0xff]
      %v226 = vld [vmem:[%s1 + $0xb8] sm:$0xff]
      %v227 = vld [vmem:[%s1 + $0xc0] sm:$0xff]
      %v228 = vld [vmem:[%s1 + $0xc8] sm:$0xff]
      %v229 = vld [vmem:[%s1 + $0xd0] sm:$0xff]
      %v230 = vld [vmem:[%s1 + $0xd8] sm:$0xff]
      %v231 = vld [vmem:[%s1 + $0xe0] sm:$0xff]
      %v232 = vld [vmem:[%s1 + $0xe8] sm:$0xff]
      %v233 = vld [vmem:[%s1 + $0xf0] sm:$0xff]
      %v234 = vld [vmem:[%s1 + $0xf8] sm:$0xff]
      %v235 = vld [vmem:[%s1 + $0x100] sm:$0xff]
      %v236 = vld [vmem:[%s1 + $0x108] sm:$0xff]
      %v237 = vld [vmem:[%s1 + $0x110] sm:$0xff]
      %v238 = vld [vmem:[%s1 + $0x118] sm:$0xff]
      %v239 = vld [vmem:[%s1 + $0x120] sm:$0xff]
      %v240 = vld [vmem:[%s1 + $0x128] sm:$0xff]
      %v241 = vld [vmem:[%s1 + $0x130] sm:$0xff]
      %v242 = vld [vmem:[%s1 + $0x138] sm:$0xff]
      %v243 = vld [vmem:[%s1 + $0x140] sm:$0xff]
      %v244 = vld [vmem:[%s1 + $0x148] sm:$0xff]
      %v245 = vld [vmem:[%s1 + $0x150] sm:$0xff]
      %v246 = vld [vmem:[%s1 + $0x158] sm:$0xff]
      %v247 = vld [vmem:[%s1 + $0x160] sm:$0xff]
      %v248 = vld [vmem:[%s1 + $0x168] sm:$0xff]
      %v249 = vld [vmem:[%s1 + $0x170] sm:$0xff]
      %v250 = vld [vmem:[%s1 + $0x178] sm:$0xff]
      %v283 = vunpack.c.l.b16 %v171
      %v284 = vunpack.c.h.b16 %v171
      %v285 = vunpack.c.l.b16 %v172
      %v286 = vunpack.c.l.b16 %v173
      %v287 = vunpack.c.h.b16 %v173
      %v288 = vunpack.c.l.b16 %v174
      %v289 = vunpack.c.l.b16 %v175
      %v290 = vunpack.c.h.b16 %v175
      %v291 = vunpack.c.l.b16 %v176
      %v292 = vunpack.c.l.b16 %v177
      %v293 = vunpack.c.h.b16 %v177
      %v294 = vunpack.c.l.b16 %v178
      %v295 = vunpack.c.l.b16 %v179
      %v296 = vunpack.c.h.b16 %v179
      %v297 = vunpack.c.l.b16 %v180
      %v298 = vunpack.c.l.b16 %v181
      %v299 = vunpack.c.h.b16 %v181
      %v300 = vunpack.c.l.b16 %v182
      %v301 = vunpack.c.l.b16 %v183
      %v302 = vunpack.c.h.b16 %v183
      %v303 = vunpack.c.l.b16 %v184
      %v304 = vunpack.c.l.b16 %v185
      %v305 = vunpack.c.h.b16 %v185
      %v306 = vunpack.c.l.b16 %v186
      %v307 = vunpack.c.l.b16 %v187
      %v308 = vunpack.c.h.b16 %v187
      %v309 = vunpack.c.l.b16 %v188
      %v310 = vunpack.c.l.b16 %v189
      %v311 = vunpack.c.h.b16 %v189
      %v312 = vunpack.c.l.b16 %v190
      %v313 = vunpack.c.l.b16 %v191
      %v314 = vunpack.c.h.b16 %v191
      %v315 = vunpack.c.l.b16 %v192
      %v316 = vunpack.c.l.b16 %v193
      %v317 = vunpack.c.h.b16 %v193
      %v318 = vunpack.c.l.b16 %v194
      %v319 = vunpack.c.l.b16 %v195
      %v320 = vunpack.c.h.b16 %v195
      %v321 = vunpack.c.l.b16 %v196
      %v322 = vunpack.c.l.b16 %v197
      %v323 = vunpack.c.h.b16 %v197
      %v324 = vunpack.c.l.b16 %v198
      %v325 = vunpack.c.l.b16 %v199
      %v326 = vunpack.c.h.b16 %v199
      %v327 = vunpack.c.l.b16 %v200
      %v328 = vunpack.c.l.b16 %v201
      %v329 = vunpack.c.h.b16 %v201
      %v330 = vunpack.c.l.b16 %v202
      %v331 = vpack.c.b16 %v286, %v283
      %v332 = vpack.c.b16 %v287, %v284
      %v333 = vpack.c.b16 %v288, %v285
      %v334 = vpack.c.b16 %v292, %v289
      %v335 = vpack.c.b16 %v293, %v290
      %v336 = vpack.c.b16 %v294, %v291
      %v337 = vpack.c.b16 %v298, %v295
      %v338 = vpack.c.b16 %v299, %v296
      %v339 = vpack.c.b16 %v300, %v297
      %v340 = vpack.c.b16 %v304, %v301
      %v341 = vpack.c.b16 %v305, %v302
      %v342 = vpack.c.b16 %v306, %v303
      %v343 = vpack.c.b16 %v310, %v307
      %v344 = vpack.c.b16 %v311, %v308
      %v345 = vpack.c.b16 %v312, %v309
      %v346 = vpack.c.b16 %v316, %v313
      %v347 = vpack.c.b16 %v317, %v314
      %v348 = vpack.c.b16 %v318, %v315
      %v349 = vpack.c.b16 %v322, %v319
      %v350 = vpack.c.b16 %v323, %v320
      %v351 = vpack.c.b16 %v324, %v321
      %v352 = vpack.c.b16 %v328, %v325
      %v353 = vpack.c.b16 %v329, %v326
      %v354 = vpack.c.b16 %v330, %v327
      %v427 = vunpack.c.l.b16 %v203
      %v428 = vunpack.c.h.b16 %v203
      %v429 = vunpack.c.l.b16 %v204
      %v430 = vunpack.c.h.b16 %v204
      %v431 = vunpack.c.l.b16 %v205
      %v432 = vunpack.c.h.b16 %v205
      %v433 = vunpack.c.l.b16 %v206
      %v434 = vunpack.c.h.b16 %v206
      %v435 = vunpack.c.l.b16 %v207
      %v436 = vunpack.c.h.b16 %v207
      %v437 = vunpack.c.l.b16 %v208
      %v438 = vunpack.c.h.b16 %v208
      %v439 = vunpack.c.l.b16 %v209
      %v440 = vunpack.c.h.b16 %v209
      %v441 = vunpack.c.l.b16 %v210
      %v442 = vunpack.c.h.b16 %v210
      %v443 = vunpack.c.l.b16 %v211
      %v444 = vunpack.c.h.b16 %v211
      %v445 = vunpack.c.l.b16 %v212
      %v446 = vunpack.c.h.b16 %v212
      %v447 = vunpack.c.l.b16 %v213
      %v448 = vunpack.c.h.b16 %v213
      %v449 = vunpack.c.l.b16 %v214
      %v450 = vunpack.c.h.b16 %v214
      %v451 = vunpack.c.l.b16 %v215
      %v452 = vunpack.c.h.b16 %v215
      %v453 = vunpack.c.l.b16 %v216
      %v454 = vunpack.c.h.b16 %v216
      %v455 = vunpack.c.l.b16 %v217
      %v456 = vunpack.c.h.b16 %v217
      %v457 = vunpack.c.l.b16 %v218
      %v458 = vunpack.c.h.b16 %v218
      %v459 = vunpack.c.l.b16 %v219
      %v460 = vunpack.c.h.b16 %v219
      %v461 = vunpack.c.l.b16 %v220
      %v462 = vunpack.c.h.b16 %v220
      %v463 = vunpack.c.l.b16 %v221
      %v464 = vunpack.c.h.b16 %v221
      %v465 = vunpack.c.l.b16 %v222
      %v466 = vunpack.c.h.b16 %v222
      %v467 = vunpack.c.l.b16 %v223
      %v468 = vunpack.c.h.b16 %v223
      %v469 = vunpack.c.l.b16 %v224
      %v470 = vunpack.c.h.b16 %v224
      %v471 = vunpack.c.l.b16 %v225
      %v472 = vunpack.c.h.b16 %v225
      %v473 = vunpack.c.l.b16 %v226
      %v474 = vunpack.c.h.b16 %v226
      %v475 = vunpack.c.l.b16 %v227
      %v476 = vunpack.c.h.b16 %v227
      %v477 = vunpack.c.l.b16 %v228
      %v478 = vunpack.c.h.b16 %v228
      %v479 = vunpack.c.l.b16 %v229
      %v480 = vunpack.c.h.b16 %v229
      %v481 = vunpack.c.l.b16 %v230
      %v482 = vunpack.c.h.b16 %v230
      %v483 = vunpack.c.l.b16 %v231
      %v484 = vunpack.c.h.b16 %v231
      %v485 = vunpack.c.l.b16 %v232
      %v486 = vunpack.c.h.b16 %v232
      %v487 = vunpack.c.l.b16 %v233
      %v488 = vunpack.c.h.b16 %v233
      %v489 = vunpack.c.l.b16 %v234
      %v490 = vunpack.c.h.b16 %v234
      %v491 = vunpack.c.l.b16 %v235
      %v492 = vunpack.c.h.b16 %v235
      %v493 = vunpack.c.l.b16 %v236
      %v494 = vunpack.c.h.b16 %v236
      %v495 = vunpack.c.l.b16 %v237
      %v496 = vunpack.c.h.b16 %v237
      %v497 = vunpack.c.l.b16 %v238
      %v498 = vunpack.c.h.b16 %v238
      %v499 = vunpack.c.l.b16 %v239
      %v500 = vunpack.c.h.b16 %v239
      %v501 = vunpack.c.l.b16 %v240
      %v502 = vunpack.c.h.b16 %v240
      %v503 = vunpack.c.l.b16 %v241
      %v504 = vunpack.c.h.b16 %v241
      %v505 = vunpack.c.l.b16 %v242
      %v506 = vunpack.c.h.b16 %v242
      %v507 = vunpack.c.l.b16 %v243
      %v508 = vunpack.c.h.b16 %v243
      %v509 = vunpack.c.l.b16 %v244
      %v510 = vunpack.c.h.b16 %v244
      %v511 = vunpack.c.l.b16 %v245
      %v512 = vunpack.c.h.b16 %v245
      %v513 = vunpack.c.l.b16 %v246
      %v514 = vunpack.c.h.b16 %v246
      %v515 = vunpack.c.l.b16 %v247
      %v516 = vunpack.c.h.b16 %v247
      %v517 = vunpack.c.l.b16 %v248
      %v518 = vunpack.c.h.b16 %v248
      %v519 = vunpack.c.l.b16 %v249
      %v520 = vunpack.c.h.b16 %v249
      %v521 = vunpack.c.l.b16 %v250
      %v522 = vunpack.c.h.b16 %v250
      %v523 = vpack.c.b16 %v429, %v427
      %v524 = vpack.c.b16 %v430, %v428
      %v525 = vpack.c.b16 %v433, %v431
      %v526 = vpack.c.b16 %v434, %v432
      %v527 = vpack.c.b16 %v437, %v435
      %v528 = vpack.c.b16 %v438, %v436
      %v529 = vpack.c.b16 %v441, %v439
      %v530 = vpack.c.b16 %v442, %v440
      %v531 = vpack.c.b16 %v445, %v443
      %v532 = vpack.c.b16 %v446, %v444
      %v533 = vpack.c.b16 %v449, %v447
      %v534 = vpack.c.b16 %v450, %v448
      %v535 = vpack.c.b16 %v453, %v451
      %v536 = vpack.c.b16 %v454, %v452
      %v537 = vpack.c.b16 %v457, %v455
      %v538 = vpack.c.b16 %v458, %v456
      %v539 = vpack.c.b16 %v461, %v459
      %v540 = vpack.c.b16 %v462, %v460
      %v541 = vpack.c.b16 %v465, %v463
      %v542 = vpack.c.b16 %v466, %v464
      %v543 = vpack.c.b16 %v469, %v467
      %v544 = vpack.c.b16 %v470, %v468
      %v545 = vpack.c.b16 %v473, %v471
      %v546 = vpack.c.b16 %v474, %v472
      %v547 = vpack.c.b16 %v477, %v475
      %v548 = vpack.c.b16 %v478, %v476
      %v549 = vpack.c.b16 %v481, %v479
      %v550 = vpack.c.b16 %v482, %v480
      %v551 = vpack.c.b16 %v485, %v483
      %v552 = vpack.c.b16 %v486, %v484
      %v553 = vpack.c.b16 %v489, %v487
      %v554 = vpack.c.b16 %v490, %v488
      %v555 = vpack.c.b16 %v493, %v491
      %v556 = vpack.c.b16 %v494, %v492
      %v557 = vpack.c.b16 %v497, %v495
      %v558 = vpack.c.b16 %v498, %v496
      %v559 = vpack.c.b16 %v501, %v499
      %v560 = vpack.c.b16 %v502, %v500
      %v561 = vpack.c.b16 %v505, %v503
      %v562 = vpack.c.b16 %v506, %v504
      %v563 = vpack.c.b16 %v509, %v507
      %v564 = vpack.c.b16 %v510, %v508
      %v565 = vpack.c.b16 %v513, %v511
      %v566 = vpack.c.b16 %v514, %v512
      %v567 = vpack.c.b16 %v517, %v515
      %v568 = vpack.c.b16 %v518, %v516
      %v569 = vpack.c.b16 %v521, %v519
      %v570 = vpack.c.b16 %v522, %v520
      %619 = vmatpush.bf16.msra.mxu0 %v537
      %620 = vmatpush.bf16.msra.mxu0 %v535
      %621 = vmatpush.bf16.msra.mxu0 %v533
      %622 = vmatpush.bf16.msra.mxu0 %v531
      %623 = vmatpush.bf16.msra.mxu0 %v529
      %624 = vmatpush.bf16.msra.mxu0 %v527
      %625 = vmatpush.bf16.msra.mxu0 %v525
      %626 = vmatpush.bf16.msra.mxu0 %v523
      %627 = vmatmul.bf16.gmra.mxu0 %v331
      %v628 = vpop.f32.mrf.mxu0
      %v629 = vadd.f32 0.0, %v628
      %v630 = vpop.f32.mrf.mxu0
      %v631 = vadd.f32 0.0, %v630
      %632 = vmatmul.bf16.gmra.mxu0 %v334
      %v633 = vpop.f32.mrf.mxu0
      %v634 = vadd.f32 0.0, %v633
      %v635 = vpop.f32.mrf.mxu0
      %v636 = vadd.f32 0.0, %v635
      %637 = vmatmul.bf16.gmra.mxu0 %v337
      %v638 = vpop.f32.mrf.mxu0
      %v639 = vadd.f32 0.0, %v638
      %v640 = vpop.f32.mrf.mxu0
      %v641 = vadd.f32 0.0, %v640
      %642 = vmatmul.bf16.gmra.mxu0 %v340
      %v643 = vpop.f32.mrf.mxu0
      %v644 = vadd.f32 0.0, %v643
      %v645 = vpop.f32.mrf.mxu0
      %v646 = vadd.f32 0.0, %v645
      %647 = vmatmul.bf16.gmra.mxu0 %v343
      %v648 = vpop.f32.mrf.mxu0
      %v649 = vadd.f32 0.0, %v648
      %v650 = vpop.f32.mrf.mxu0
      %v651 = vadd.f32 0.0, %v650
      %652 = vmatmul.bf16.gmra.mxu0 %v346
      %v653 = vpop.f32.mrf.mxu0
      %v654 = vadd.f32 0.0, %v653
      %v655 = vpop.f32.mrf.mxu0
      %v656 = vadd.f32 0.0, %v655
      %657 = vmatmul.bf16.gmra.mxu0 %v349
      %v658 = vpop.f32.mrf.mxu0
      %v659 = vadd.f32 0.0, %v658
      %v660 = vpop.f32.mrf.mxu0
      %v661 = vadd.f32 0.0, %v660
      %662 = vmatmul.bf16.gmra.mxu0 %v352
      %v663 = vpop.f32.mrf.mxu0
      %v664 = vadd.f32 0.0, %v663
      %v665 = vpop.f32.mrf.mxu0
      %v666 = vadd.f32 0.0, %v665
      %667 = vdwg.mxu0
      %668 = vmatpush.bf16.msra.mxu0 %v553
      %669 = vmatpush.bf16.msra.mxu0 %v551
      %670 = vmatpush.bf16.msra.mxu0 %v549
      %671 = vmatpush.bf16.msra.mxu0 %v547
      %672 = vmatpush.bf16.msra.mxu0 %v545
      %673 = vmatpush.bf16.msra.mxu0 %v543
      %674 = vmatpush.bf16.msra.mxu0 %v541
      %675 = vmatpush.bf16.msra.mxu0 %v539
      %676 = vmatmul.bf16.gmra.mxu0 %v332
      %v677 = vpop.f32.mrf.mxu0
      %v678 = vadd.f32 %v629, %v677
      %v679 = vpop.f32.mrf.mxu0
      %v680 = vadd.f32 %v631, %v679
      %681 = vmatmul.bf16.gmra.mxu0 %v335
      %v682 = vpop.f32.mrf.mxu0
      %v683 = vadd.f32 %v634, %v682
      %v684 = vpop.f32.mrf.mxu0
      %v685 = vadd.f32 %v636, %v684
      %686 = vmatmul.bf16.gmra.mxu0 %v338
      %v687 = vpop.f32.mrf.mxu0
      %v688 = vadd.f32 %v639, %v687
      %v689 = vpop.f32.mrf.mxu0
      %v690 = vadd.f32 %v641, %v689
      %691 = vmatmul.bf16.gmra.mxu0 %v341
      %v692 = vpop.f32.mrf.mxu0
      %v693 = vadd.f32 %v644, %v692
      %v694 = vpop.f32.mrf.mxu0
      %v695 = vadd.f32 %v646, %v694
      %696 = vmatmul.bf16.gmra.mxu0 %v344
      %v697 = vpop.f32.mrf.mxu0
      %v698 = vadd.f32 %v649, %v697
      %v699 = vpop.f32.mrf.mxu0
      %v700 = vadd.f32 %v651, %v699
      %701 = vmatmul.bf16.gmra.mxu0 %v347
      %v702 = vpop.f32.mrf.mxu0
      %v703 = vadd.f32 %v654, %v702
      %v704 = vpop.f32.mrf.mxu0
      %v705 = vadd.f32 %v656, %v704
      %706 = vmatmul.bf16.gmra.mxu0 %v350
      %v707 = vpop.f32.mrf.mxu0
      %v708 = vadd.f32 %v659, %v707
      %v709 = vpop.f32.mrf.mxu0
      %v710 = vadd.f32 %v661, %v709
      %711 = vmatmul.bf16.gmra.mxu0 %v353
      %v712 = vpop.f32.mrf.mxu0
      %v713 = vadd.f32 %v664, %v712
      %v714 = vpop.f32.mrf.mxu0
      %v715 = vadd.f32 %v666, %v714
      %716 = vdwg.mxu0
      %717 = vmatpush.bf16.msra.mxu0 %v569
      %718 = vmatpush.bf16.msra.mxu0 %v567
      %719 = vmatpush.bf16.msra.mxu0 %v565
      %720 = vmatpush.bf16.msra.mxu0 %v563
      %721 = vmatpush.bf16.msra.mxu0 %v561
      %722 = vmatpush.bf16.msra.mxu0 %v559
      %723 = vmatpush.bf16.msra.mxu0 %v557
      %724 = vmatpush.bf16.msra.mxu0 %v555
      %725 = vmatmul.bf16.gmra.mxu0 %v333
      %v726 = vpop.f32.mrf.mxu0
      %v727 = vadd.f32 %v678, %v726
      %v728 = vpop.f32.mrf.mxu0
      %v729 = vadd.f32 %v680, %v728
      %730 = vmatmul.bf16.gmra.mxu0 %v336
      %v731 = vpop.f32.mrf.mxu0
      %v732 = vadd.f32 %v683, %v731
      %v733 = vpop.f32.mrf.mxu0
      %v734 = vadd.f32 %v685, %v733
      %735 = vmatmul.bf16.gmra.mxu0 %v339
      %v736 = vpop.f32.mrf.mxu0
      %v737 = vadd.f32 %v688, %v736
      %v738 = vpop.f32.mrf.mxu0
      %v739 = vadd.f32 %v690, %v738
      %740 = vmatmul.bf16.gmra.mxu0 %v342
      %v741 = vpop.f32.mrf.mxu0
      %v742 = vadd.f32 %v693, %v741
      %v743 = vpop.f32.mrf.mxu0
      %v744 = vadd.f32 %v695, %v743
      %745 = vmatmul.bf16.gmra.mxu0 %v345
      %v746 = vpop.f32.mrf.mxu0
      %v747 = vadd.f32 %v698, %v746
      %v748 = vpop.f32.mrf.mxu0
      %v749 = vadd.f32 %v700, %v748
      %750 = vmatmul.bf16.gmra.mxu0 %v348
      %v751 = vpop.f32.mrf.mxu0
      %v752 = vadd.f32 %v703, %v751
      %v753 = vpop.f32.mrf.mxu0
      %v754 = vadd.f32 %v705, %v753
      %755 = vmatmul.bf16.gmra.mxu0 %v351
      %v756 = vpop.f32.mrf.mxu0
      %v757 = vadd.f32 %v708, %v756
      %v758 = vpop.f32.mrf.mxu0
      %v759 = vadd.f32 %v710, %v758
      %760 = vmatmul.bf16.gmra.mxu0 %v354
      %v761 = vpop.f32.mrf.mxu0
      %v762 = vadd.f32 %v713, %v761
      %v763 = vpop.f32.mrf.mxu0
      %v764 = vadd.f32 %v715, %v763
      %765 = vdwg.mxu0
      %766 = vmatpush.bf16.msra.mxu0 %v538
      %767 = vmatpush.bf16.msra.mxu0 %v536
      %768 = vmatpush.bf16.msra.mxu0 %v534
      %769 = vmatpush.bf16.msra.mxu0 %v532
      %770 = vmatpush.bf16.msra.mxu0 %v530
      %771 = vmatpush.bf16.msra.mxu0 %v528
      %772 = vmatpush.bf16.msra.mxu0 %v526
      %773 = vmatpush.bf16.msra.mxu0 %v524
      %774 = vmatmul.bf16.gmra.mxu0 %v331
      %v775 = vpop.f32.mrf.mxu0
      %v776 = vadd.f32 0.0, %v775
      %v777 = vpop.f32.mrf.mxu0
      %v778 = vadd.f32 0.0, %v777
      %779 = vmatmul.bf16.gmra.mxu0 %v334
      %v780 = vpop.f32.mrf.mxu0
      %v781 = vadd.f32 0.0, %v780
      %v782 = vpop.f32.mrf.mxu0
      %v783 = vadd.f32 0.0, %v782
      %784 = vmatmul.bf16.gmra.mxu0 %v337
      %v785 = vpop.f32.mrf.mxu0
      %v786 = vadd.f32 0.0, %v785
      %v787 = vpop.f32.mrf.mxu0
      %v788 = vadd.f32 0.0, %v787
      %789 = vmatmul.bf16.gmra.mxu0 %v340
      %v790 = vpop.f32.mrf.mxu0
      %v791 = vadd.f32 0.0, %v790
      %v792 = vpop.f32.mrf.mxu0
      %v793 = vadd.f32 0.0, %v792
      %794 = vmatmul.bf16.gmra.mxu0 %v343
      %v795 = vpop.f32.mrf.mxu0
      %v796 = vadd.f32 0.0, %v795
      %v797 = vpop.f32.mrf.mxu0
      %v798 = vadd.f32 0.0, %v797
      %799 = vmatmul.bf16.gmra.mxu0 %v346
      %v800 = vpop.f32.mrf.mxu0
      %v801 = vadd.f32 0.0, %v800
      %v802 = vpop.f32.mrf.mxu0
      %v803 = vadd.f32 0.0, %v802
      %804 = vmatmul.bf16.gmra.mxu0 %v349
      %v805 = vpop.f32.mrf.mxu0
      %v806 = vadd.f32 0.0, %v805
      %v807 = vpop.f32.mrf.mxu0
      %v808 = vadd.f32 0.0, %v807
      %809 = vmatmul.bf16.gmra.mxu0 %v352
      %v810 = vpop.f32.mrf.mxu0
      %v811 = vadd.f32 0.0, %v810
      %v812 = vpop.f32.mrf.mxu0
      %v813 = vadd.f32 0.0, %v812
      %814 = vdwg.mxu0
      %815 = vmatpush.bf16.msra.mxu0 %v554
      %816 = vmatpush.bf16.msra.mxu0 %v552
      %817 = vmatpush.bf16.msra.mxu0 %v550
      %818 = vmatpush.bf16.msra.mxu0 %v548
      %819 = vmatpush.bf16.msra.mxu0 %v546
      %820 = vmatpush.bf16.msra.mxu0 %v544
      %821 = vmatpush.bf16.msra.mxu0 %v542
      %822 = vmatpush.bf16.msra.mxu0 %v540
      %823 = vmatmul.bf16.gmra.mxu0 %v332
      %v824 = vpop.f32.mrf.mxu0
      %v825 = vadd.f32 %v776, %v824
      %v826 = vpop.f32.mrf.mxu0
      %v827 = vadd.f32 %v778, %v826
      %828 = vmatmul.bf16.gmra.mxu0 %v335
      %v829 = vpop.f32.mrf.mxu0
      %v830 = vadd.f32 %v781, %v829
      %v831 = vpop.f32.mrf.mxu0
      %v832 = vadd.f32 %v783, %v831
      %833 = vmatmul.bf16.gmra.mxu0 %v338
      %v834 = vpop.f32.mrf.mxu0
      %v835 = vadd.f32 %v786, %v834
      %v836 = vpop.f32.mrf.mxu0
      %v837 = vadd.f32 %v788, %v836
      %838 = vmatmul.bf16.gmra.mxu0 %v341
      %v839 = vpop.f32.mrf.mxu0
      %v840 = vadd.f32 %v791, %v839
      %v841 = vpop.f32.mrf.mxu0
      %v842 = vadd.f32 %v793, %v841
      %843 = vmatmul.bf16.gmra.mxu0 %v344
      %v844 = vpop.f32.mrf.mxu0
      %v845 = vadd.f32 %v796, %v844
      %v846 = vpop.f32.mrf.mxu0
      %v847 = vadd.f32 %v798, %v846
      %848 = vmatmul.bf16.gmra.mxu0 %v347
      %v849 = vpop.f32.mrf.mxu0
      %v850 = vadd.f32 %v801, %v849
      %v851 = vpop.f32.mrf.mxu0
      %v852 = vadd.f32 %v803, %v851
      %853 = vmatmul.bf16.gmra.mxu0 %v350
      %v854 = vpop.f32.mrf.mxu0
      %v855 = vadd.f32 %v806, %v854
      %v856 = vpop.f32.mrf.mxu0
      %v857 = vadd.f32 %v808, %v856
      %858 = vmatmul.bf16.gmra.mxu0 %v353
      %v859 = vpop.f32.mrf.mxu0
      %v860 = vadd.f32 %v811, %v859
      %v861 = vpop.f32.mrf.mxu0
      %v862 = vadd.f32 %v813, %v861
      %863 = vdwg.mxu0
      %864 = vmatpush.bf16.msra.mxu0 %v570
      %865 = vmatpush.bf16.msra.mxu0 %v568
      %866 = vmatpush.bf16.msra.mxu0 %v566
      %867 = vmatpush.bf16.msra.mxu0 %v564
      %868 = vmatpush.bf16.msra.mxu0 %v562
      %869 = vmatpush.bf16.msra.mxu0 %v560
      %870 = vmatpush.bf16.msra.mxu0 %v558
      %871 = vmatpush.bf16.msra.mxu0 %v556
      %872 = vmatmul.bf16.gmra.mxu0 %v333
      %v873 = vpop.f32.mrf.mxu0
      %v874 = vadd.f32 %v825, %v873
      %v875 = vpop.f32.mrf.mxu0
      %v876 = vadd.f32 %v827, %v875
      %877 = vmatmul.bf16.gmra.mxu0 %v336
      %v878 = vpop.f32.mrf.mxu0
      %v879 = vadd.f32 %v830, %v878
      %v880 = vpop.f32.mrf.mxu0
      %v881 = vadd.f32 %v832, %v880
      %882 = vmatmul.bf16.gmra.mxu0 %v339
      %v883 = vpop.f32.mrf.mxu0
      %v884 = vadd.f32 %v835, %v883
      %v885 = vpop.f32.mrf.mxu0
      %v886 = vadd.f32 %v837, %v885
      %887 = vmatmul.bf16.gmra.mxu0 %v342
      %v888 = vpop.f32.mrf.mxu0
      %v889 = vadd.f32 %v840, %v888
      %v890 = vpop.f32.mrf.mxu0
      %v891 = vadd.f32 %v842, %v890
      %892 = vmatmul.bf16.gmra.mxu0 %v345
      %v893 = vpop.f32.mrf.mxu0
      %v894 = vadd.f32 %v845, %v893
      %v895 = vpop.f32.mrf.mxu0
      %v896 = vadd.f32 %v847, %v895
      %897 = vmatmul.bf16.gmra.mxu0 %v348
      %v898 = vpop.f32.mrf.mxu0
      %v899 = vadd.f32 %v850, %v898
      %v900 = vpop.f32.mrf.mxu0
      %v901 = vadd.f32 %v852, %v900
      %902 = vmatmul.bf16.gmra.mxu0 %v351
      %v903 = vpop.f32.mrf.mxu0
      %v904 = vadd.f32 %v855, %v903
      %v905 = vpop.f32.mrf.mxu0
      %v906 = vadd.f32 %v857, %v905
      %907 = vmatmul.bf16.gmra.mxu0 %v354
      %v908 = vpop.f32.mrf.mxu0
      %v909 = vadd.f32 %v860, %v908
      %v910 = vpop.f32.mrf.mxu0
      %v911 = vadd.f32 %v862, %v910
      %912 = vdwg.mxu0
      %v913 = vpack.c.bf16 %v727, %v727
      %v914 = vpack.c.bf16 %v729, %v729
      %v915 = vpack.c.bf16 %v732, %v732
      %v916 = vpack.c.bf16 %v734, %v734
      %v917 = vpack.c.bf16 %v737, %v737
      %v918 = vpack.c.bf16 %v739, %v739
      %v919 = vpack.c.bf16 %v742, %v742
      %v920 = vpack.c.bf16 %v744, %v744
      %v921 = vpack.c.bf16 %v747, %v747
      %v922 = vpack.c.bf16 %v749, %v749
      %v923 = vpack.c.bf16 %v752, %v752
      %v924 = vpack.c.bf16 %v754, %v754
      %v925 = vpack.c.bf16 %v757, %v757
      %v926 = vpack.c.bf16 %v759, %v759
      %v927 = vpack.c.bf16 %v762, %v762
      %v928 = vpack.c.bf16 %v764, %v764
      %v929 = vpack.c.bf16 %v874, %v874
      %v930 = vpack.c.bf16 %v876, %v876
      %v931 = vpack.c.bf16 %v879, %v879
      %v932 = vpack.c.bf16 %v881, %v881
      %v933 = vpack.c.bf16 %v884, %v884
      %v934 = vpack.c.bf16 %v886, %v886
      %v935 = vpack.c.bf16 %v889, %v889
      %v936 = vpack.c.bf16 %v891, %v891
      %v937 = vpack.c.bf16 %v894, %v894
      %v938 = vpack.c.bf16 %v896, %v896
      %v939 = vpack.c.bf16 %v899, %v899
      %v940 = vpack.c.bf16 %v901, %v901
      %v941 = vpack.c.bf16 %v904, %v904
      %v942 = vpack.c.bf16 %v906, %v906
      %v943 = vpack.c.bf16 %v909, %v909
      %v944 = vpack.c.bf16 %v911, %v911
      %v945 = vld [vmem:[%s2] sm:$0xff]
      %v946 = vld [vmem:[%s2 + $0x8] sm:$0xff]
      %v947 = vld [vmem:[%s2 + $0x10] sm:$0xff]
      %v948 = vld [vmem:[%s2 + $0x18] sm:$0xff]
      %v949 = vld [vmem:[%s2 + $0x20] sm:$0xff]
      %v950 = vld [vmem:[%s2 + $0x28] sm:$0xff]
      %v951 = vld [vmem:[%s2 + $0x30] sm:$0xff]
      %v952 = vld [vmem:[%s2 + $0x38] sm:$0xff]
      %v953 = vld [vmem:[%s2 + $0x40] sm:$0xff]
      %v954 = vld [vmem:[%s2 + $0x48] sm:$0xff]
      %v955 = vld [vmem:[%s2 + $0x50] sm:$0xff]
      %v956 = vld [vmem:[%s2 + $0x58] sm:$0xff]
      %v957 = vld [vmem:[%s2 + $0x60] sm:$0xff]
      %v958 = vld [vmem:[%s2 + $0x68] sm:$0xff]
      %v959 = vld [vmem:[%s2 + $0x70] sm:$0xff]
      %v960 = vld [vmem:[%s2 + $0x78] sm:$0xff]
      %v977 = vunpack.c.l.b16 %v913
      %v978 = vunpack.c.l.b16 %v914
      %v979 = vunpack.c.l.b16 %v915
      %v980 = vunpack.c.l.b16 %v916
      %v981 = vunpack.c.l.b16 %v917
      %v982 = vunpack.c.l.b16 %v918
      %v983 = vunpack.c.l.b16 %v919
      %v984 = vunpack.c.l.b16 %v920
      %v985 = vunpack.c.l.b16 %v921
      %v986 = vunpack.c.l.b16 %v922
      %v987 = vunpack.c.l.b16 %v923
      %v988 = vunpack.c.l.b16 %v924
      %v989 = vunpack.c.l.b16 %v925
      %v990 = vunpack.c.l.b16 %v926
      %v991 = vunpack.c.l.b16 %v927
      %v992 = vunpack.c.l.b16 %v928
      %v993 = vpack.c.b16 %v978, %v977
      %v994 = vpack.c.b16 %v980, %v979
      %v995 = vpack.c.b16 %v982, %v981
      %v996 = vpack.c.b16 %v984, %v983
      %v997 = vpack.c.b16 %v986, %v985
      %v998 = vpack.c.b16 %v988, %v987
      %v999 = vpack.c.b16 %v990, %v989
      %v1000 = vpack.c.b16 %v992, %v991
      %1001 = vrot.lane.b32.xlu0 %v993, 64
      %v1002 = vpop.permute.xlu0 %1001
      %1003 = vrot.lane.b32.xlu0 %v994, 64
      %v1004 = vpop.permute.xlu0 %1003
      %1005 = vrot.lane.b32.xlu0 %v995, 64
      %v1006 = vpop.permute.xlu0 %1005
      %1007 = vrot.lane.b32.xlu0 %v996, 64
      %v1008 = vpop.permute.xlu0 %1007
      %1009 = vrot.lane.b32.xlu0 %v997, 64
      %v1010 = vpop.permute.xlu0 %1009
      %1011 = vrot.lane.b32.xlu0 %v998, 64
      %v1012 = vpop.permute.xlu0 %1011
      %1013 = vrot.lane.b32.xlu0 %v999, 64
      %v1014 = vpop.permute.xlu0 %1013
      %1015 = vrot.lane.b32.xlu0 %v1000, 64
      %v1016 = vpop.permute.xlu0 %1015
      %vm1017 = vcmask 523264
      %v1019 = vsel %vm1017, %v1002, 0
      %v1022 = vsel %vm1017, %v1004, 0
      %v1025 = vsel %vm1017, %v1006, 0
      %v1028 = vsel %vm1017, %v1008, 0
      %v1031 = vsel %vm1017, %v1010, 0
      %v1034 = vsel %vm1017, %v1012, 0
      %v1037 = vsel %vm1017, %v1014, 0
      %v1040 = vsel %vm1017, %v1016, 0
      %v1043 = vsel %vm1017, %v993, 0
      %v1046 = vsel %vm1017, %v994, 0
      %v1049 = vsel %vm1017, %v995, 0
      %v1052 = vsel %vm1017, %v996, 0
      %v1055 = vsel %vm1017, %v997, 0
      %v1058 = vsel %vm1017, %v998, 0
      %v1061 = vsel %vm1017, %v999, 0
      %v1064 = vsel %vm1017, %v1000, 0
      %1066 = vmatpush.bf16.xpose.msra.mxu0 %v1064
      %1067 = vmatpush.bf16.xpose.msra.mxu0 %v1061
      %1068 = vmatpush.bf16.xpose.msra.mxu0 %v1058
      %1069 = vmatpush.bf16.xpose.msra.mxu0 %v1055
      %1070 = vmatpush.bf16.xpose.msra.mxu0 %v1052
      %1071 = vmatpush.bf16.xpose.msra.mxu0 %v1049
      %1072 = vmatpush.bf16.xpose.msra.mxu0 %v1046
      %1073 = vmatpush.bf16.xpose.msra.mxu0 %v1043
      %1074 = vmatmul.bf16.gmra.mxu0 %v1019
      %v1075 = vpop.f32.mrf.mxu0
      %v1076 = vadd.f32 %v945, %v1075
      %v1077 = vpop.f32.mrf.mxu0
      %v1078 = vadd.f32 %v946, %v1077
      %1079 = vmatmul.bf16.gmra.mxu0 %v1022
      %v1080 = vpop.f32.mrf.mxu0
      %v1081 = vadd.f32 %v947, %v1080
      %v1082 = vpop.f32.mrf.mxu0
      %v1083 = vadd.f32 %v948, %v1082
      %1084 = vmatmul.bf16.gmra.mxu0 %v1025
      %v1085 = vpop.f32.mrf.mxu0
      %v1086 = vadd.f32 %v949, %v1085
      %v1087 = vpop.f32.mrf.mxu0
      %v1088 = vadd.f32 %v950, %v1087
      %1089 = vmatmul.bf16.gmra.mxu0 %v1028
      %v1090 = vpop.f32.mrf.mxu0
      %v1091 = vadd.f32 %v951, %v1090
      %v1092 = vpop.f32.mrf.mxu0
      %v1093 = vadd.f32 %v952, %v1092
      %1094 = vmatmul.bf16.gmra.mxu0 %v1031
      %v1095 = vpop.f32.mrf.mxu0
      %v1096 = vadd.f32 %v953, %v1095
      %v1097 = vpop.f32.mrf.mxu0
      %v1098 = vadd.f32 %v954, %v1097
      %1099 = vmatmul.bf16.gmra.mxu0 %v1034
      %v1100 = vpop.f32.mrf.mxu0
      %v1101 = vadd.f32 %v955, %v1100
      %v1102 = vpop.f32.mrf.mxu0
      %v1103 = vadd.f32 %v956, %v1102
      %1104 = vmatmul.bf16.gmra.mxu0 %v1037
      %v1105 = vpop.f32.mrf.mxu0
      %v1106 = vadd.f32 %v957, %v1105
      %v1107 = vpop.f32.mrf.mxu0
      %v1108 = vadd.f32 %v958, %v1107
      %1109 = vmatmul.bf16.gmra.mxu0 %v1040
      %v1110 = vpop.f32.mrf.mxu0
      %v1111 = vadd.f32 %v959, %v1110
      %v1112 = vpop.f32.mrf.mxu0
      %v1113 = vadd.f32 %v960, %v1112
      %1114 = vdwg.mxu0
      %1115 = vmax.xlane.f32.xlu0 %v1076
      %v1116 = vpop.xlane.xlu0 %1115
      %1117 = vmax.xlane.f32.xlu0 %v1078
      %v1118 = vpop.xlane.xlu0 %1117
      %1119 = vmax.xlane.f32.xlu0 %v1081
      %v1120 = vpop.xlane.xlu0 %1119
      %1121 = vmax.xlane.f32.xlu0 %v1083
      %v1122 = vpop.xlane.xlu0 %1121
      %1123 = vmax.xlane.f32.xlu0 %v1086
      %v1124 = vpop.xlane.xlu0 %1123
      %1125 = vmax.xlane.f32.xlu0 %v1088
      %v1126 = vpop.xlane.xlu0 %1125
      %1127 = vmax.xlane.f32.xlu0 %v1091
      %v1128 = vpop.xlane.xlu0 %1127
      %1129 = vmax.xlane.f32.xlu0 %v1093
      %v1130 = vpop.xlane.xlu0 %1129
      %1131 = vmax.xlane.f32.xlu0 %v1096
      %v1132 = vpop.xlane.xlu0 %1131
      %1133 = vmax.xlane.f32.xlu0 %v1098
      %v1134 = vpop.xlane.xlu0 %1133
      %1135 = vmax.xlane.f32.xlu0 %v1101
      %v1136 = vpop.xlane.xlu0 %1135
      %1137 = vmax.xlane.f32.xlu0 %v1103
      %v1138 = vpop.xlane.xlu0 %1137
      %1139 = vmax.xlane.f32.xlu0 %v1106
      %v1140 = vpop.xlane.xlu0 %1139
      %1141 = vmax.xlane.f32.xlu0 %v1108
      %v1142 = vpop.xlane.xlu0 %1141
      %1143 = vmax.xlane.f32.xlu0 %v1111
      %v1144 = vpop.xlane.xlu0 %1143
      %1145 = vmax.xlane.f32.xlu0 %v1113
      %v1146 = vpop.xlane.xlu0 %1145
      %v1147 = vsub.f32 %v1076, %v1116
      %v1148 = vsub.f32 %v1078, %v1118
      %v1149 = vsub.f32 %v1081, %v1120
      %v1150 = vsub.f32 %v1083, %v1122
      %v1151 = vsub.f32 %v1086, %v1124
      %v1152 = vsub.f32 %v1088, %v1126
      %v1153 = vsub.f32 %v1091, %v1128
      %v1154 = vsub.f32 %v1093, %v1130
      %v1155 = vsub.f32 %v1096, %v1132
      %v1156 = vsub.f32 %v1098, %v1134
      %v1157 = vsub.f32 %v1101, %v1136
      %v1158 = vsub.f32 %v1103, %v1138
      %v1159 = vsub.f32 %v1106, %v1140
      %v1160 = vsub.f32 %v1108, %v1142
      %v1161 = vsub.f32 %v1111, %v1144
      %v1162 = vsub.f32 %v1113, %v1146
      %v1163 = vmul.f32 %v1147, 1.442695
      %v1164 = vpow.pop %v1163
      %v1165 = vmul.f32 %v1148, 1.442695
      %v1166 = vpow.pop %v1165
      %v1167 = vmul.f32 %v1149, 1.442695
      %v1168 = vpow.pop %v1167
      %v1169 = vmul.f32 %v1150, 1.442695
      %v1170 = vpow.pop %v1169
      %v1171 = vmul.f32 %v1151, 1.442695
      %v1172 = vpow.pop %v1171
      %v1173 = vmul.f32 %v1152, 1.442695
      %v1174 = vpow.pop %v1173
      %v1175 = vmul.f32 %v1153, 1.442695
      %v1176 = vpow.pop %v1175
      %v1177 = vmul.f32 %v1154, 1.442695
      %v1178 = vpow.pop %v1177
      %v1179 = vmul.f32 %v1155, 1.442695
      %v1180 = vpow.pop %v1179
      %v1181 = vmul.f32 %v1156, 1.442695
      %v1182 = vpow.pop %v1181
      %v1183 = vmul.f32 %v1157, 1.442695
      %v1184 = vpow.pop %v1183
      %v1185 = vmul.f32 %v1158, 1.442695
      %v1186 = vpow.pop %v1185
      %v1187 = vmul.f32 %v1159, 1.442695
      %v1188 = vpow.pop %v1187
      %v1189 = vmul.f32 %v1160, 1.442695
      %v1190 = vpow.pop %v1189
      %v1191 = vmul.f32 %v1161, 1.442695
      %v1192 = vpow.pop %v1191
      %v1193 = vmul.f32 %v1162, 1.442695
      %v1194 = vpow.pop %v1193
      %1195 = vadd.xlane.f32.xlu0 %v1164
      %v1196 = vpop.xlane.xlu0 %1195
      %1197 = vadd.xlane.f32.xlu0 %v1166
      %v1198 = vpop.xlane.xlu0 %1197
      %1199 = vadd.xlane.f32.xlu0 %v1168
      %v1200 = vpop.xlane.xlu0 %1199
      %1201 = vadd.xlane.f32.xlu0 %v1170
      %v1202 = vpop.xlane.xlu0 %1201
      %1203 = vadd.xlane.f32.xlu0 %v1172
      %v1204 = vpop.xlane.xlu0 %1203
      %1205 = vadd.xlane.f32.xlu0 %v1174
      %v1206 = vpop.xlane.xlu0 %1205
      %1207 = vadd.xlane.f32.xlu0 %v1176
      %v1208 = vpop.xlane.xlu0 %1207
      %1209 = vadd.xlane.f32.xlu0 %v1178
      %v1210 = vpop.xlane.xlu0 %1209
      %1211 = vadd.xlane.f32.xlu0 %v1180
      %v1212 = vpop.xlane.xlu0 %1211
      %1213 = vadd.xlane.f32.xlu0 %v1182
      %v1214 = vpop.xlane.xlu0 %1213
      %1215 = vadd.xlane.f32.xlu0 %v1184
      %v1216 = vpop.xlane.xlu0 %1215
      %1217 = vadd.xlane.f32.xlu0 %v1186
      %v1218 = vpop.xlane.xlu0 %1217
      %1219 = vadd.xlane.f32.xlu0 %v1188
      %v1220 = vpop.xlane.xlu0 %1219
      %1221 = vadd.xlane.f32.xlu0 %v1190
      %v1222 = vpop.xlane.xlu0 %1221
      %1223 = vadd.xlane.f32.xlu0 %v1192
      %v1224 = vpop.xlane.xlu0 %1223
      %1225 = vadd.xlane.f32.xlu0 %v1194
      %v1226 = vpop.xlane.xlu0 %1225
      %v1227 = vrcp.pop %v1196
      %v1228 = vrcp.pop %v1198
      %v1229 = vrcp.pop %v1200
      %v1230 = vrcp.pop %v1202
      %v1231 = vrcp.pop %v1204
      %v1232 = vrcp.pop %v1206
      %v1233 = vrcp.pop %v1208
      %v1234 = vrcp.pop %v1210
      %v1235 = vrcp.pop %v1212
      %v1236 = vrcp.pop %v1214
      %v1237 = vrcp.pop %v1216
      %v1238 = vrcp.pop %v1218
      %v1239 = vrcp.pop %v1220
      %v1240 = vrcp.pop %v1222
      %v1241 = vrcp.pop %v1224
      %v1242 = vrcp.pop %v1226
      %v1243 = vmul.f32 %v1164, %v1227
      %v1244 = vmul.f32 %v1166, %v1228
      %v1245 = vmul.f32 %v1168, %v1229
      %v1246 = vmul.f32 %v1170, %v1230
      %v1247 = vmul.f32 %v1172, %v1231
      %v1248 = vmul.f32 %v1174, %v1232
      %v1249 = vmul.f32 %v1176, %v1233
      %v1250 = vmul.f32 %v1178, %v1234
      %v1251 = vmul.f32 %v1180, %v1235
      %v1252 = vmul.f32 %v1182, %v1236
      %v1253 = vmul.f32 %v1184, %v1237
      %v1254 = vmul.f32 %v1186, %v1238
      %v1255 = vmul.f32 %v1188, %v1239
      %v1256 = vmul.f32 %v1190, %v1240
      %v1257 = vmul.f32 %v1192, %v1241
      %v1258 = vmul.f32 %v1194, %v1242
      %v1259 = vpack.c.bf16 %v1243, %v1243
      %v1260 = vpack.c.bf16 %v1244, %v1244
      %v1261 = vpack.c.bf16 %v1245, %v1245
      %v1262 = vpack.c.bf16 %v1246, %v1246
      %v1263 = vpack.c.bf16 %v1247, %v1247
      %v1264 = vpack.c.bf16 %v1248, %v1248
      %v1265 = vpack.c.bf16 %v1249, %v1249
      %v1266 = vpack.c.bf16 %v1250, %v1250
      %v1267 = vpack.c.bf16 %v1251, %v1251
      %v1268 = vpack.c.bf16 %v1252, %v1252
      %v1269 = vpack.c.bf16 %v1253, %v1253
      %v1270 = vpack.c.bf16 %v1254, %v1254
      %v1271 = vpack.c.bf16 %v1255, %v1255
      %v1272 = vpack.c.bf16 %v1256, %v1256
      %v1273 = vpack.c.bf16 %v1257, %v1257
      %v1274 = vpack.c.bf16 %v1258, %v1258
      %v1291 = vunpack.c.l.b16 %v1259
      %v1292 = vunpack.c.l.b16 %v1260
      %v1293 = vunpack.c.l.b16 %v1261
      %v1294 = vunpack.c.l.b16 %v1262
      %v1295 = vunpack.c.l.b16 %v1263
      %v1296 = vunpack.c.l.b16 %v1264
      %v1297 = vunpack.c.l.b16 %v1265
      %v1298 = vunpack.c.l.b16 %v1266
      %v1299 = vunpack.c.l.b16 %v1267
      %v1300 = vunpack.c.l.b16 %v1268
      %v1301 = vunpack.c.l.b16 %v1269
      %v1302 = vunpack.c.l.b16 %v1270
      %v1303 = vunpack.c.l.b16 %v1271
      %v1304 = vunpack.c.l.b16 %v1272
      %v1305 = vunpack.c.l.b16 %v1273
      %v1306 = vunpack.c.l.b16 %v1274
      %v1307 = vpack.c.b16 %v1292, %v1291
      %v1308 = vpack.c.b16 %v1294, %v1293
      %v1309 = vpack.c.b16 %v1296, %v1295
      %v1310 = vpack.c.b16 %v1298, %v1297
      %v1311 = vpack.c.b16 %v1300, %v1299
      %v1312 = vpack.c.b16 %v1302, %v1301
      %v1313 = vpack.c.b16 %v1304, %v1303
      %v1314 = vpack.c.b16 %v1306, %v1305
      %v1339 = vunpack.c.l.b16 %v929
      %v1340 = vunpack.c.l.b16 %v930
      %v1341 = vunpack.c.l.b16 %v931
      %v1342 = vunpack.c.l.b16 %v932
      %v1343 = vunpack.c.l.b16 %v933
      %v1344 = vunpack.c.l.b16 %v934
      %v1345 = vunpack.c.l.b16 %v935
      %v1346 = vunpack.c.l.b16 %v936
      %v1347 = vunpack.c.l.b16 %v937
      %v1348 = vunpack.c.l.b16 %v938
      %v1349 = vunpack.c.l.b16 %v939
      %v1350 = vunpack.c.l.b16 %v940
      %v1351 = vunpack.c.l.b16 %v941
      %v1352 = vunpack.c.l.b16 %v942
      %v1353 = vunpack.c.l.b16 %v943
      %v1354 = vunpack.c.l.b16 %v944
      %v1355 = vpack.c.b16 %v1340, %v1339
      %v1356 = vpack.c.b16 %v1342, %v1341
      %v1357 = vpack.c.b16 %v1344, %v1343
      %v1358 = vpack.c.b16 %v1346, %v1345
      %v1359 = vpack.c.b16 %v1348, %v1347
      %v1360 = vpack.c.b16 %v1350, %v1349
      %v1361 = vpack.c.b16 %v1352, %v1351
      %v1362 = vpack.c.b16 %v1354, %v1353
      %1371 = vmatpush.bf16.msra.mxu0 %v1362
      %1372 = vmatpush.bf16.msra.mxu0 %v1361
      %1373 = vmatpush.bf16.msra.mxu0 %v1360
      %1374 = vmatpush.bf16.msra.mxu0 %v1359
      %1375 = vmatpush.bf16.msra.mxu0 %v1358
      %1376 = vmatpush.bf16.msra.mxu0 %v1357
      %1377 = vmatpush.bf16.msra.mxu0 %v1356
      %1378 = vmatpush.bf16.msra.mxu0 %v1355
      %1379 = vmatmul.bf16.gmra.mxu0 %v1307
      %v1380 = vpop.f32.mrf.mxu0
      %v1381 = vadd.f32 0.0, %v1380
      %v1382 = vpop.f32.mrf.mxu0
      %v1383 = vadd.f32 0.0, %v1382
      %1384 = vmatmul.bf16.gmra.mxu0 %v1308
      %v1385 = vpop.f32.mrf.mxu0
      %v1386 = vadd.f32 0.0, %v1385
      %v1387 = vpop.f32.mrf.mxu0
      %v1388 = vadd.f32 0.0, %v1387
      %1389 = vmatmul.bf16.gmra.mxu0 %v1309
      %v1390 = vpop.f32.mrf.mxu0
      %v1391 = vadd.f32 0.0, %v1390
      %v1392 = vpop.f32.mrf.mxu0
      %v1393 = vadd.f32 0.0, %v1392
      %1394 = vmatmul.bf16.gmra.mxu0 %v1310
      %v1395 = vpop.f32.mrf.mxu0
      %v1396 = vadd.f32 0.0, %v1395
      %v1397 = vpop.f32.mrf.mxu0
      %v1398 = vadd.f32 0.0, %v1397
      %1399 = vmatmul.bf16.gmra.mxu0 %v1311
      %v1400 = vpop.f32.mrf.mxu0
      %v1401 = vadd.f32 0.0, %v1400
      %v1402 = vpop.f32.mrf.mxu0
      %v1403 = vadd.f32 0.0, %v1402
      %1404 = vmatmul.bf16.gmra.mxu0 %v1312
      %v1405 = vpop.f32.mrf.mxu0
      %v1406 = vadd.f32 0.0, %v1405
      %v1407 = vpop.f32.mrf.mxu0
      %v1408 = vadd.f32 0.0, %v1407
      %1409 = vmatmul.bf16.gmra.mxu0 %v1313
      %v1410 = vpop.f32.mrf.mxu0
      %v1411 = vadd.f32 0.0, %v1410
      %v1412 = vpop.f32.mrf.mxu0
      %v1413 = vadd.f32 0.0, %v1412
      %1414 = vmatmul.bf16.gmra.mxu0 %v1314
      %v1415 = vpop.f32.mrf.mxu0
      %v1416 = vadd.f32 0.0, %v1415
      %v1417 = vpop.f32.mrf.mxu0
      %v1418 = vadd.f32 0.0, %v1417
      %1419 = vdwg.mxu0
      %1420 = vst.msk [vmem:[%s170] sm:$0xff] %vm1017, %v1381
      %1421 = vst.msk [vmem:[%s170 + $0x8] sm:$0xff] %vm1017, %v1383
      %1422 = vst.msk [vmem:[%s170 + $0x10] sm:$0xff] %vm1017, %v1386
      %1423 = vst.msk [vmem:[%s170 + $0x18] sm:$0xff] %vm1017, %v1388
      %1424 = vst.msk [vmem:[%s170 + $0x20] sm:$0xff] %vm1017, %v1391
      %1425 = vst.msk [vmem:[%s170 + $0x28] sm:$0xff] %vm1017, %v1393
      %1426 = vst.msk [vmem:[%s170 + $0x30] sm:$0xff] %vm1017, %v1396
      %1427 = vst.msk [vmem:[%s170 + $0x38] sm:$0xff] %vm1017, %v1398
      %1428 = vst.msk [vmem:[%s170 + $0x40] sm:$0xff] %vm1017, %v1401
      %1429 = vst.msk [vmem:[%s170 + $0x48] sm:$0xff] %vm1017, %v1403
      %1430 = vst.msk [vmem:[%s170 + $0x50] sm:$0xff] %vm1017, %v1406
      %1431 = vst.msk [vmem:[%s170 + $0x58] sm:$0xff] %vm1017, %v1408
      %1432 = vst.msk [vmem:[%s170 + $0x60] sm:$0xff] %vm1017, %v1411
      %1433 = vst.msk [vmem:[%s170 + $0x68] sm:$0xff] %vm1017, %v1413
      %1434 = vst.msk [vmem:[%s170 + $0x70] sm:$0xff] %vm1017, %v1416
      %1435 = vst.msk [vmem:[%s170 + $0x78] sm:$0xff] %vm1017, %v1418
      %p1436 = scmp.lt.s32.totalorder %s14, 1
      %s1437 = scalar_select %p1436, %s14, 1
      %s1438 = smul.addr %s1437, 16
      %s1439 = smul.addr %s1438, 8
      %s1440 = scalar_lea.vmem %s3, %s1439
      // Predicated region
      $region33: #{tpu_custom_call.1} parent=31 // pred_check
        %p1441 = pneg %p100
      $region34: #{tpu_custom_call.1} parent=31 // pred_check_branch
        %1443 = sbr.rel (%p1441) target = $region36
      $region35: #{tpu_custom_call.1} parent=31 // pred_region
        _
      $region36: #{tpu_custom_call.1} parent=31 // pred_fallthru
        _
    $region32: #{tpu_custom_call.1} parent=5 // pred_fallthru
      _
    %p1444 = scmp.le.s32.totalorder 2, %s9
    // Predicated region
    $region37: #{tpu_custom_call.1} parent=5 // pred_check
      %p1445 = pneg %p1444
    $region38: #{tpu_custom_call.1} parent=5 // pred_check_branch
      %1447 = sbr.rel (%p1445) target = $region40
    $region39: #{tpu_custom_call.1} parent=5 // pred_region
      %s1448 = ssub.s32 %s9, 2
      // Predicated region
      $region41: #{tpu_custom_call.1} parent=39 // pred_check
        %p1449 = pneg %p106
      $region42: #{tpu_custom_call.1} parent=39 // pred_check_branch
        %1451 = sbr.rel (%p1449) target = $region44
      $region43: #{tpu_custom_call.1} parent=39 // pred_region
        %p1452 = scmp.lt.s32.totalorder %s15, 1
        %s1453 = scalar_select %p1452, %s15, 1
        %s1454 = smul.addr %s1453, 16
        %s1455 = smul.addr %s1454, 8
        %s1456 = scalar_lea.vmem %s3, %s1455
      $region44: #{tpu_custom_call.1} parent=39 // pred_fallthru
        _
    $region40: #{tpu_custom_call.1} parent=5 // pred_fallthru
      _
  $region6: #{tpu_custom_call.1} parent=0 // loop_footer
    %s13 = sadd.s32 1, %s9
  $region7: #{tpu_custom_call.1} parent=0 // loop_footer_branch
    %8 = sbr.rel target = $region3
  $region8: #{tpu_custom_call.1} parent=0 // loop_exit
    _

</llo_original>
